<compile_context>
chip_gen: v6e
topology: v6e:2x2x1
jax: 0.10.0
libtpu: 0.0.40
codegen_flags: <defaults>
</compile_context>

<pallas_src>
import jax
import jax.numpy as jnp
from jax.experimental import pallas as pl
from jax.experimental.pallas import tpu as pltpu

EPS = 1e-5


def _round_up(x, m):
    return ((x + m - 1) // m) * m


# ---------------------------------------------------------------------------
# Kernels
# ---------------------------------------------------------------------------

def _linear_bn_relu_kernel(x_ref, w_ref, shift_ref, o_ref):
    """Collapsed-K variant: one matmul per output tile, straight-line epilogue."""
    y = jnp.dot(x_ref[...], w_ref[...], preferred_element_type=jnp.float32)
    o_ref[...] = jnp.maximum(y + shift_ref[...], 0.0).astype(o_ref.dtype)


def _linear_bn_relu_kernel_kgrid(x_ref, w_ref, shift_ref, o_ref):
    """K-grid variant: accumulate directly into the (f32, k-resident) output tile."""
    k = pl.program_id(2)
    part = jnp.dot(x_ref[...], w_ref[...], preferred_element_type=jnp.float32)

    @pl.when(k == 0)
    def _first():
        o_ref[...] = part

    @pl.when(k > 0)
    def _accum():
        o_ref[...] += part

    @pl.when(k == pl.num_programs(2) - 1)
    def _finalize():
        # Folded bias + BN(eval) shift, then ReLU.  Dropout: identity (eval).
        o_ref[...] = jnp.maximum(o_ref[...] + shift_ref[...], 0.0)


# ---------------------------------------------------------------------------
# Parameter preparation (hoistable out of the per-call hot path)
# ---------------------------------------------------------------------------

def prepare_params(w, b, gamma, beta, running_mean, running_var,
                   *, eps=EPS, tn=512, tk=1024):
    """Fold BN(eval)+bias into (W', shift), cast W' to bf16 and pad to tile shape.

    w: [in_features, out_features], rest: [out_features].
    Returns (w_p [Kp, Np] bf16, shift_p [1, Np] f32, meta).
    Weights / running stats are static in eval, so this runs once, not per call.
    """
    Nin, Nout = w.shape

    #   relu(((x@W + b) - mean) * gamma * rsqrt(var+eps) + beta)
    # = relu(x @ (W * scale) + ((b - mean) * scale + beta))
    scale = gamma * jax.lax.rsqrt(running_var + eps)
    shift = (b - running_mean) * scale + beta
    w_folded = w * scale[None, :]

    # tn / tk multiples of 256 (v6e/v7x MXU is 256x256); collapse K when it fits.
    tn = min(tn, _round_up(Nout, 256))
    k_full = _round_up(Nin, 256)
    if k_full <= tk:
        tk = k_full                       # single K tile -> no K grid axis

    Np = _round_up(Nout, tn)
    Kp = _round_up(Nin, tk)

    w_p = w_folded.astype(jnp.bfloat16)
    if (Kp, Np) != (Nin, Nout):
        w_p = jnp.pad(w_p, ((0, Kp - Nin), (0, Np - Nout)))

    shift_p = shift.astype(jnp.float32)
    if Np != Nout:
        shift_p = jnp.pad(shift_p, (0, Np - Nout))
    shift_p = shift_p.reshape(1, Np)

    meta = dict(Nin=Nin, Nout=Nout, tn=tn, tk=tk)
    return w_p, shift_p, meta


# ---------------------------------------------------------------------------
# Forward pass
# ---------------------------------------------------------------------------

def dynamic_linear_block_prepared(x, w_p, shift_p, meta, *, bm=512):
    """x: [B, in_features];  w_p/shift_p/meta from prepare_params()."""
    B, Nin_x = x.shape
    Nin, Nout, tn, tk = meta["Nin"], meta["Nout"], meta["tn"], meta["tk"]
    assert Nin_x == Nin
    Kp, Np = w_p.shape

    # Batch tile: multiple of 16 (bf16 sublane packing), as large as requested.
    bm = min(bm, _round_up(B, 16))
    Bp = _round_up(B, bm)

    # v7x has 2 TensorCores: if the parallel grid collapses to a single block,
    # split the N axis so both cores get work (tn stays a multiple of 256 and
    # still divides the prepared Np).
    if Bp // bm == 1 and Np // tn == 1 and tn % 512 == 0:
        tn //= 2

    # Pad / cast activations only when ragged (weights were padded in prepare).
    x_p = x.astype(jnp.bfloat16)
    if (Bp, Kp) != (B, Nin):
        x_p = jnp.pad(x_p, ((0, Bp - B), (0, Kp - Nin)))

    gi, gj, gk = Bp // bm, Np // tn, Kp // tk
    collapse_k = (gk == 1)

    # VMEM footprint: double-buffered x/W/out tiles (+ shift row), with headroom.
    tile_bytes = 2 * (bm * tk * 2 + tk * tn * 2 + bm * tn * 4 + tn * 4)
    vmem_limit = min(max(tile_bytes + (8 << 20), 32 << 20), 48 << 20)

    cost = pl.CostEstimate(
        flops=2 * Bp * Kp * Np,
        transcendentals=0,
        bytes_accessed=(Bp * Kp * 2) * gj      # x re-streamed per N tile
                       + (Kp * Np * 2) * gi    # W re-streamed per batch tile
                       + (Np * 4) * gi         # shift row
                       + (Bp * Np * 4),        # output writeback
    )

    if collapse_k:
        grid_spec = pltpu.PrefetchScalarGridSpec(
            num_scalar_prefetch=0,
            grid=(gi, gj),
            in_specs=[
                pl.BlockSpec((bm, Kp), lambda i, j: (i, 0)),   # x tile (full K)
                pl.BlockSpec((Kp, tn), lambda i, j: (0, j)),   # folded-W tile
                pl.BlockSpec((1, tn), lambda i, j: (0, j)),    # shift row
            ],
            out_specs=pl.BlockSpec((bm, tn), lambda i, j: (i, j)),
        )
        kernel = _linear_bn_relu_kernel
        semantics = ("parallel", "parallel")
    else:
        grid_spec = pltpu.PrefetchScalarGridSpec(
            num_scalar_prefetch=0,
            grid=(gi, gj, gk),
            in_specs=[
                pl.BlockSpec((bm, tk), lambda i, j, k: (i, k)),  # x tile
                pl.BlockSpec((tk, tn), lambda i, j, k: (k, j)),  # folded-W tile
                pl.BlockSpec((1, tn), lambda i, j, k: (0, j)),   # shift row
            ],
            # Output ignores k -> f32 tile stays resident in VMEM across the
            # K axis and doubles as the accumulator (no separate scratch).
            out_specs=pl.BlockSpec((bm, tn), lambda i, j, k: (i, j)),
        )
        kernel = _linear_bn_relu_kernel_kgrid
        semantics = ("parallel", "parallel", "arbitrary")

    out = pl.pallas_call(
        kernel,
        out_shape=jax.ShapeDtypeStruct((Bp, Np), jnp.float32),
        grid_spec=grid_spec,
        compiler_params=pltpu.CompilerParams(
            dimension_semantics=semantics,
            vmem_limit_bytes=vmem_limit,
        ),
        cost_estimate=cost,
    )(x_p, w_p, shift_p)

    if (Bp, Np) != (B, Nout):
        out = out[:B, :Nout]
    return out


def dynamic_linear_block(x, w, b, gamma, beta, running_mean, running_var,
                         *, bm=512, tn=512, tk=1024, eps=EPS):
    """Convenience one-shot entry (in real use, hoist prepare_params out)."""
    w_p, shift_p, meta = prepare_params(w, b, gamma, beta, running_mean,
                                        running_var, eps=eps, tn=tn, tk=tk)
    return dynamic_linear_block_prepared(x, w_p, shift_p, meta, bm=bm)


# ---------------------------------------------------------------------------
# Reference + tests
# ---------------------------------------------------------------------------

def reference(x, w, b, gamma, beta, mean, var):
    y = x @ w + b
    y = (y - mean) / jnp.sqrt(var + EPS) * gamma + beta
    return jnp.maximum(y, 0.0)


def _make_inputs(key, B, IN_F, OUT_F):
    kx, kw, kb, kg, kbe, km, kv = jax.random.split(key, 7)
    x = jax.random.normal(kx, (B, IN_F), dtype=jnp.float32)
    bound = 1.0 / (IN_F ** 0.5)
    w = jax.random.uniform(kw, (IN_F, OUT_F), jnp.float32, -bound, bound)
    b = jax.random.uniform(kb, (OUT_F,), jnp.float32, -bound, bound)
    gamma = jnp.ones((OUT_F,), jnp.float32) + 0.1 * jax.random.normal(kg, (OUT_F,))
    beta = 0.1 * jax.random.normal(kbe, (OUT_F,))
    running_mean = 0.1 * jax.random.normal(km, (OUT_F,))
    running_var = jnp.ones((OUT_F,), jnp.float32) + 0.05 * jnp.abs(
        jax.random.normal(kv, (OUT_F,)))
    return x, w, b, gamma, beta, running_mean, running_var


if __name__ == "__main__":
    key = jax.random.PRNGKey(0)
    k1, k2 = jax.random.split(key)

    # Test 1: small shapes typical of the module -> collapsed-K straight-line path.
    B, IN_F, OUT_F = 8, 32, 32
    args = _make_inputs(k1, B, IN_F, OUT_F)
    out = jax.block_until_ready(dynamic_linear_block(*args))
    ref = reference(*args)
    assert out.shape == (B, OUT_F)
    # bf16 MXU inputs -> loosened tolerance vs the f32 reference.
    assert jnp.allclose(out, ref, atol=3e-2, rtol=3e-2), "mismatch vs reference (test 1)"

    # Test 2: ragged, non-aligned shapes with small tiles to exercise the batch /
    # Nout grid axes, the K-grid (accumulate-into-o_ref) kernel, and padding.
    B2, IN2, OUT2 = 40, 300, 260
    args2 = _make_inputs(k2, B2, IN2, OUT2)
    out2 = jax.block_until_ready(
        dynamic_linear_block(*args2, bm=16, tn=256, tk=128))
    ref2 = reference(*args2)
    assert out2.shape == (B2, OUT2)
    assert jnp.allclose(out2, ref2, atol=3e-2, rtol=3e-2), "mismatch vs reference (test 2)"

    print("KERNEL_OK")
</pallas_src>

<mosaic_0001>
module attributes {stable_mosaic.version = 11 : i64} {
  func.func @_linear_bn_relu_kernel(%arg0: i32, %arg1: i32, %arg2: memref<16x256xbf16, #tpu.memory_space<vmem>>, %arg3: memref<256x256xbf16, #tpu.memory_space<vmem>>, %arg4: memref<1x256xf32, #tpu.memory_space<vmem>>, %arg5: memref<16x256xf32, #tpu.memory_space<vmem>>) attributes {dimension_semantics = [#tpu.dimension_semantics<parallel>, #tpu.dimension_semantics<parallel>], iteration_bounds = array<i64: 1, 1>, scalar_prefetch = 0 : i64, scratch_operands = 0 : i64, tpu.core_type = #tpu.core_type<tc>, window_params = [{transform_indices = @transform_0, window_bounds = array<i64: 16, 256>}, {transform_indices = @transform_1, window_bounds = array<i64: 256, 256>}, {transform_indices = @transform_2, window_bounds = array<i64: 1, 256>}, {transform_indices = @transform_3, window_bounds = array<i64: 16, 256>}]} {
    %c0 = arith.constant 0 : index
    %c0_0 = arith.constant 0 : index
    %0 = vector.load %arg2[%c0, %c0_0] : memref<16x256xbf16, #tpu.memory_space<vmem>>, vector<16x256xbf16>
    %c0_1 = arith.constant 0 : index
    %c0_2 = arith.constant 0 : index
    %1 = vector.load %arg3[%c0_1, %c0_2] : memref<256x256xbf16, #tpu.memory_space<vmem>>, vector<256x256xbf16>
    %cst = arith.constant dense<0.000000e+00> : vector<16x256xf32>
    %2 = tpu.matmul %0, %1, %cst {dimension_numbers = #tpu.dot_dimension_numbers<[1], [0], [0], [1], [0, 0, 1, 1], [], []>} : vector<16x256xbf16>, vector<256x256xbf16>, vector<16x256xf32> -> vector<16x256xf32>
    %c0_3 = arith.constant 0 : index
    %c0_4 = arith.constant 0 : index
    %3 = vector.load %arg4[%c0_3, %c0_4] : memref<1x256xf32, #tpu.memory_space<vmem>>, vector<1x256xf32>
    %4 = vector.broadcast %3 : vector<1x256xf32> to vector<16x256xf32>
    %5 = arith.addf %2, %4 : vector<16x256xf32>
    %cst_5 = arith.constant 0.000000e+00 : f32
    %6 = vector.broadcast %cst_5 : f32 to vector<16x256xf32>
    %7 = arith.maximumf %5, %6 : vector<16x256xf32>
    %c0_6 = arith.constant 0 : index
    %c0_7 = arith.constant 0 : index
    %8 = vector.load %arg5[%c0_6, %c0_7] : memref<16x256xf32, #tpu.memory_space<vmem>>, vector<16x256xf32>
    tpu.vector_store %arg5[%c0_6, %c0_7], %7 {strides = array<i32>} : memref<16x256xf32, #tpu.memory_space<vmem>>, vector<16x256xf32>,
    return
  }
  func.func @transform_0(%arg0: i32, %arg1: i32) -> (i32, i32) {
    %c0_i32 = arith.constant 0 : i32
    %c0_i32_0 = arith.constant 0 : i32
    return %arg0, %c0_i32 : i32, i32
  }
  func.func @transform_1(%arg0: i32, %arg1: i32) -> (i32, i32) {
    %c0_i32 = arith.constant 0 : i32
    %c0_i32_0 = arith.constant 0 : i32
    return %c0_i32, %arg1 : i32, i32
  }
  func.func @transform_2(%arg0: i32, %arg1: i32) -> (i32, i32) {
    %c0_i32 = arith.constant 0 : i32
    %c0_i32_0 = arith.constant 0 : i32
    return %c0_i32, %arg1 : i32, i32
  }
  func.func @transform_3(%arg0: i32, %arg1: i32) -> (i32, i32) {
    %c0_i32 = arith.constant 0 : i32
    return %arg0, %arg1 : i32, i32
  }
}

</mosaic_0001>

<llo_original>
// kernel: tpu_custom_call.1
$region0: #{tpu_custom_call.1}
  #allocation0 [shape = 'u32[]', space=smem, size = 0x4, offset = 0x4, fixed_abs, tag = 'smem constant byte address 0x4 - core index']
  #allocation1 [shape = 'u32[144,128]{1,0:T(1,128)}', space=vmem, size = 0x12000, scoped, tag = 'internal scratch']
  %s0 = inlined_call_operand.hbm [shape: bf16[16,256], index: 0, kind: input, shape index: {}]
  %s1 = inlined_call_operand.hbm [shape: bf16[256,256], index: 1, kind: input, shape index: {}]
  %s2 = inlined_call_operand.vmem [shape: f32[1,256], index: 2, kind: input, shape index: {}]
  %s3 = inlined_call_operand.hbm [shape: f32[16,256], index: 3, kind: output, shape index: {}]
  %s4 = sld [smem:[#allocation0]]
  $region30: #{tpu_custom_call.1} parent=0
    _
  %s6 = ssub.s32 1, %s4
  %s7 = scalar_select 0, %s6, %s4
  $region1: #{tpu_custom_call.1} parent=0
    #allocation2 [shape = 'u8[8192]{0}', space=vmem, size = 0x2000, scoped, tag = 'input window, operand 0, single buffered']
    #allocation3 [shape = 's32[1]{0}', space=sflag, size = 0x4, scoped, tag = 'scoped memory for tpu_custom_call.1']
    #allocation4 [shape = 's32[1]{0}', space=sflag, size = 0x4, scoped, tag = 'scoped memory for tpu_custom_call.1']
    #allocation5 [shape = 'u8[131072]{0}', space=vmem, size = 0x20000, scoped, tag = 'input window, operand 1, single buffered']
    #allocation6 [shape = 's32[1]{0}', space=sflag, size = 0x4, scoped, tag = 'scoped memory for tpu_custom_call.1']
    #allocation7 [shape = 'u8[16384]{0}', space=vmem, size = 0x4000, scoped, tag = 'output window, operand 0, single buffered']
    %8 = vsyncpa [#allocation3], 0
    %9 = vsyncpa [#allocation6], 0
    %10 = vsyncpa [#allocation4], 0
    // Predicated region
    $region2: #{tpu_custom_call.1} parent=1 // pred_check
      _
    $region3: #{tpu_custom_call.1} parent=1 // pred_check_branch
      %12 = sbr.rel (0) target = $region5
    $region4: #{tpu_custom_call.1} parent=1 // pred_region
      %s14 = ssub.s32 256, 256
      %15 = vsyncadd [#allocation3], %s14
      %s16 = sshll.u32 [#allocation2], 4
      %s17 = int_to_ptr.vmem [resolvable:$true] %s16
      %22 = dma.hbm_to_vmem [thread:$0]  %s0, 256, %s17, [#allocation3], 128, 128, 8
    $region5: #{tpu_custom_call.1} parent=1 // pred_fallthru
      _
    // Predicated region
    $region6: #{tpu_custom_call.1} parent=1 // pred_check
      _
    $region7: #{tpu_custom_call.1} parent=1 // pred_check_branch
      %24 = sbr.rel (0) target = $region9
    $region8: #{tpu_custom_call.1} parent=1 // pred_region
      %s26 = ssub.s32 4096, 4096
      %27 = vsyncadd [#allocation6], %s26
      %s28 = sshll.u32 [#allocation5], 4
      %s29 = int_to_ptr.vmem [resolvable:$true] %s28
      %34 = dma.hbm_to_vmem [thread:$0]  %s1, 4096, %s29, [#allocation6], 128, 128, 8
    $region9: #{tpu_custom_call.1} parent=1 // pred_fallthru
      _
    // Predicated region
    $region10: #{tpu_custom_call.1} parent=1 // pred_check
      _
    $region11: #{tpu_custom_call.1} parent=1 // pred_check_branch
      %36 = sbr.rel (0) target = $region13
    $region12: #{tpu_custom_call.1} parent=1 // pred_region
      _
    $region13: #{tpu_custom_call.1} parent=1 // pred_fallthru
      _
    // Predicated region
    $region14: #{tpu_custom_call.1} parent=1 // pred_check
      _
    $region15: #{tpu_custom_call.1} parent=1 // pred_check_branch
      %38 = sbr.rel (0) target = $region17
    $region16: #{tpu_custom_call.1} parent=1 // pred_region
      %39 = dma.done [#allocation3], 256
    $region17: #{tpu_custom_call.1} parent=1 // pred_fallthru
      _
    // Predicated region
    $region18: #{tpu_custom_call.1} parent=1 // pred_check
      _
    $region19: #{tpu_custom_call.1} parent=1 // pred_check_branch
      %41 = sbr.rel (0) target = $region21
    $region20: #{tpu_custom_call.1} parent=1 // pred_region
      %42 = dma.done [#allocation6], 4096
    $region21: #{tpu_custom_call.1} parent=1 // pred_fallthru
      _
    %v43 = vld [vmem:[#allocation2] sm:$0xff]
    %v44 = vld [vmem:[#allocation2 + $0x8] sm:$0xff]
    %v45 = vld [vmem:[#allocation5] sm:$0xff]
    %v46 = vld [vmem:[#allocation5 + $0x8] sm:$0xff]
    %v47 = vld [vmem:[#allocation5 + $0x10] sm:$0xff]
    %v48 = vld [vmem:[#allocation5 + $0x18] sm:$0xff]
    %v49 = vld [vmem:[#allocation5 + $0x20] sm:$0xff]
    %v50 = vld [vmem:[#allocation5 + $0x28] sm:$0xff]
    %v51 = vld [vmem:[#allocation5 + $0x30] sm:$0xff]
    %v52 = vld [vmem:[#allocation5 + $0x38] sm:$0xff]
    %v53 = vld [vmem:[#allocation5 + $0x40] sm:$0xff]
    %v54 = vld [vmem:[#allocation5 + $0x48] sm:$0xff]
    %v55 = vld [vmem:[#allocation5 + $0x50] sm:$0xff]
    %v56 = vld [vmem:[#allocation5 + $0x58] sm:$0xff]
    %v57 = vld [vmem:[#allocation5 + $0x60] sm:$0xff]
    %v58 = vld [vmem:[#allocation5 + $0x68] sm:$0xff]
    %v59 = vld [vmem:[#allocation5 + $0x70] sm:$0xff]
    %v60 = vld [vmem:[#allocation5 + $0x78] sm:$0xff]
    %v61 = vld [vmem:[#allocation5 + $0x80] sm:$0xff]
    %v62 = vld [vmem:[#allocation5 + $0x88] sm:$0xff]
    %v63 = vld [vmem:[#allocation5 + $0x90] sm:$0xff]
    %v64 = vld [vmem:[#allocation5 + $0x98] sm:$0xff]
    %v65 = vld [vmem:[#allocation5 + $0xa0] sm:$0xff]
    %v66 = vld [vmem:[#allocation5 + $0xa8] sm:$0xff]
    %v67 = vld [vmem:[#allocation5 + $0xb0] sm:$0xff]
    %v68 = vld [vmem:[#allocation5 + $0xb8] sm:$0xff]
    %v69 = vld [vmem:[#allocation5 + $0xc0] sm:$0xff]
    %v70 = vld [vmem:[#allocation5 + $0xc8] sm:$0xff]
    %v71 = vld [vmem:[#allocation5 + $0xd0] sm:$0xff]
    %v72 = vld [vmem:[#allocation5 + $0xd8] sm:$0xff]
    %v73 = vld [vmem:[#allocation5 + $0xe0] sm:$0xff]
    %v74 = vld [vmem:[#allocation5 + $0xe8] sm:$0xff]
    %v75 = vld [vmem:[#allocation5 + $0xf0] sm:$0xff]
    %v76 = vld [vmem:[#allocation5 + $0xf8] sm:$0xff]
    %v77 = vld [vmem:[%s2] sm:$0x3]
    %v79 = vlaneseq
    %v80 = vshrl.u32 %v79, 7
    %v81 = vsub.s32 0, %v80
    %v82 = vrot.slane %v77, %v81
    %v83 = vlaneseq
    %v84 = vshrl.u32 %v83, 7
    %v85 = vsub.s32 1, %v84
    %v86 = vrot.slane %v77, %v85
    %v91 = vunpack.c.l.b16 %v43
    %v92 = vunpack.c.h.b16 %v43
    %v93 = vunpack.c.l.b16 %v44
    %v94 = vunpack.c.h.b16 %v44
    %v95 = vpack.c.b16 %v93, %v91
    %v96 = vpack.c.b16 %v94, %v92
    %v131 = vunpack.c.l.b16 %v45
    %v132 = vunpack.c.h.b16 %v45
    %v133 = vunpack.c.l.b16 %v46
    %v134 = vunpack.c.h.b16 %v46
    %v135 = vunpack.c.l.b16 %v47
    %v136 = vunpack.c.h.b16 %v47
    %v137 = vunpack.c.l.b16 %v48
    %v138 = vunpack.c.h.b16 %v48
    %v139 = vunpack.c.l.b16 %v49
    %v140 = vunpack.c.h.b16 %v49
    %v141 = vunpack.c.l.b16 %v50
    %v142 = vunpack.c.h.b16 %v50
    %v143 = vunpack.c.l.b16 %v51
    %v144 = vunpack.c.h.b16 %v51
    %v145 = vunpack.c.l.b16 %v52
    %v146 = vunpack.c.h.b16 %v52
    %v147 = vunpack.c.l.b16 %v53
    %v148 = vunpack.c.h.b16 %v53
    %v149 = vunpack.c.l.b16 %v54
    %v150 = vunpack.c.h.b16 %v54
    %v151 = vunpack.c.l.b16 %v55
    %v152 = vunpack.c.h.b16 %v55
    %v153 = vunpack.c.l.b16 %v56
    %v154 = vunpack.c.h.b16 %v56
    %v155 = vunpack.c.l.b16 %v57
    %v156 = vunpack.c.h.b16 %v57
    %v157 = vunpack.c.l.b16 %v58
    %v158 = vunpack.c.h.b16 %v58
    %v159 = vunpack.c.l.b16 %v59
    %v160 = vunpack.c.h.b16 %v59
    %v161 = vunpack.c.l.b16 %v60
    %v162 = vunpack.c.h.b16 %v60
    %v163 = vunpack.c.l.b16 %v61
    %v164 = vunpack.c.h.b16 %v61
    %v165 = vunpack.c.l.b16 %v62
    %v166 = vunpack.c.h.b16 %v62
    %v167 = vunpack.c.l.b16 %v63
    %v168 = vunpack.c.h.b16 %v63
    %v169 = vunpack.c.l.b16 %v64
    %v170 = vunpack.c.h.b16 %v64
    %v171 = vunpack.c.l.b16 %v65
    %v172 = vunpack.c.h.b16 %v65
    %v173 = vunpack.c.l.b16 %v66
    %v174 = vunpack.c.h.b16 %v66
    %v175 = vunpack.c.l.b16 %v67
    %v176 = vunpack.c.h.b16 %v67
    %v177 = vunpack.c.l.b16 %v68
    %v178 = vunpack.c.h.b16 %v68
    %v179 = vunpack.c.l.b16 %v69
    %v180 = vunpack.c.h.b16 %v69
    %v181 = vunpack.c.l.b16 %v70
    %v182 = vunpack.c.h.b16 %v70
    %v183 = vunpack.c.l.b16 %v71
    %v184 = vunpack.c.h.b16 %v71
    %v185 = vunpack.c.l.b16 %v72
    %v186 = vunpack.c.h.b16 %v72
    %v187 = vunpack.c.l.b16 %v73
    %v188 = vunpack.c.h.b16 %v73
    %v189 = vunpack.c.l.b16 %v74
    %v190 = vunpack.c.h.b16 %v74
    %v191 = vunpack.c.l.b16 %v75
    %v192 = vunpack.c.h.b16 %v75
    %v193 = vunpack.c.l.b16 %v76
    %v194 = vunpack.c.h.b16 %v76
    %v195 = vpack.c.b16 %v133, %v131
    %v196 = vpack.c.b16 %v134, %v132
    %v197 = vpack.c.b16 %v137, %v135
    %v198 = vpack.c.b16 %v138, %v136
    %v199 = vpack.c.b16 %v141, %v139
    %v200 = vpack.c.b16 %v142, %v140
    %v201 = vpack.c.b16 %v145, %v143
    %v202 = vpack.c.b16 %v146, %v144
    %v203 = vpack.c.b16 %v149, %v147
    %v204 = vpack.c.b16 %v150, %v148
    %v205 = vpack.c.b16 %v153, %v151
    %v206 = vpack.c.b16 %v154, %v152
    %v207 = vpack.c.b16 %v157, %v155
    %v208 = vpack.c.b16 %v158, %v156
    %v209 = vpack.c.b16 %v161, %v159
    %v210 = vpack.c.b16 %v162, %v160
    %v211 = vpack.c.b16 %v165, %v163
    %v212 = vpack.c.b16 %v166, %v164
    %v213 = vpack.c.b16 %v169, %v167
    %v214 = vpack.c.b16 %v170, %v168
    %v215 = vpack.c.b16 %v173, %v171
    %v216 = vpack.c.b16 %v174, %v172
    %v217 = vpack.c.b16 %v177, %v175
    %v218 = vpack.c.b16 %v178, %v176
    %v219 = vpack.c.b16 %v181, %v179
    %v220 = vpack.c.b16 %v182, %v180
    %v221 = vpack.c.b16 %v185, %v183
    %v222 = vpack.c.b16 %v186, %v184
    %v223 = vpack.c.b16 %v189, %v187
    %v224 = vpack.c.b16 %v190, %v188
    %v225 = vpack.c.b16 %v193, %v191
    %v226 = vpack.c.b16 %v194, %v192
    %259 = vmatprep.subr.bf16.mxu0 %v210
    %260 = vmatpush1.bf16.msra.mxu0 %v209
    %261 = vmatprep.subr.bf16.mxu0 %v208
    %262 = vmatpush1.bf16.msra.mxu0 %v207
    %263 = vmatprep.subr.bf16.mxu0 %v206
    %264 = vmatpush1.bf16.msra.mxu0 %v205
    %265 = vmatprep.subr.bf16.mxu0 %v204
    %266 = vmatpush1.bf16.msra.mxu0 %v203
    %267 = vmatprep.subr.bf16.mxu0 %v202
    %268 = vmatpush1.bf16.msra.mxu0 %v201
    %269 = vmatprep.subr.bf16.mxu0 %v200
    %270 = vmatpush1.bf16.msra.mxu0 %v199
    %271 = vmatprep.subr.bf16.mxu0 %v198
    %272 = vmatpush1.bf16.msra.mxu0 %v197
    %273 = vmatprep.subr.bf16.mxu0 %v196
    %274 = vmatpush1.bf16.msra.mxu0 %v195
    %275 = vmatprep.subr.bf16.mxu0 %v226
    %276 = vmatpush2.bf16.msra.mxu0 %v225
    %277 = vmatprep.subr.bf16.mxu0 %v224
    %278 = vmatpush2.bf16.msra.mxu0 %v223
    %279 = vmatprep.subr.bf16.mxu0 %v222
    %280 = vmatpush2.bf16.msra.mxu0 %v221
    %281 = vmatprep.subr.bf16.mxu0 %v220
    %282 = vmatpush2.bf16.msra.mxu0 %v219
    %283 = vmatprep.subr.bf16.mxu0 %v218
    %284 = vmatpush2.bf16.msra.mxu0 %v217
    %285 = vmatprep.subr.bf16.mxu0 %v216
    %286 = vmatpush2.bf16.msra.mxu0 %v215
    %287 = vmatprep.subr.bf16.mxu0 %v214
    %288 = vmatpush2.bf16.msra.mxu0 %v213
    %289 = vmatprep.subr.bf16.mxu0 %v212
    %290 = vmatpush2.bf16.msra.mxu0 %v211
    %291 = vmatprep.mubr.bf16.mxu0 %v96
    %292 = vmatmul.mubr.bf16.gmra.mxu0 %v95
    %v293 = vpop.f32.mrf.mxu0
    %v294 = vadd.f32 %v82, %v293
    %v295 = vpop.f32.mrf.mxu0
    %v296 = vadd.f32 %v86, %v295
    %v297 = vpop.f32.mrf.mxu0
    %v298 = vadd.f32 %v82, %v297
    %v299 = vpop.f32.mrf.mxu0
    %v300 = vadd.f32 %v86, %v299
    %301 = vdwg.mxu0
    %v302 = vmax.f32 %v294, 0.0
    %v303 = vmax.f32 %v296, 0.0
    %v304 = vmax.f32 %v298, 0.0
    %v305 = vmax.f32 %v300, 0.0
    %306 = vst [vmem:[#allocation7] sm:$0xff] %v302
    %307 = vst [vmem:[#allocation7 + $0x8] sm:$0xff] %v303
    %308 = vst [vmem:[#allocation7 + $0x10] sm:$0xff] %v304
    %309 = vst [vmem:[#allocation7 + $0x18] sm:$0xff] %v305
    // Predicated region
    $region22: #{tpu_custom_call.1} parent=1 // pred_check
      _
    $region23: #{tpu_custom_call.1} parent=1 // pred_check_branch
      %311 = sbr.rel (0) target = $region25
    $region24: #{tpu_custom_call.1} parent=1 // pred_region
      %s313 = ssub.s32 512, 512
      %314 = vsyncadd [#allocation4], %s313
      %s315 = sshll.u32 [#allocation7], 4
      %s316 = int_to_ptr.vmem [resolvable:$true] %s315
      %321 = dma.vmem_to_hbm [thread:$0]  %s316, 512, %s3, [#allocation4], 256, 256, 16
    $region25: #{tpu_custom_call.1} parent=1 // pred_fallthru
      _
    // Predicated region
    $region26: #{tpu_custom_call.1} parent=1 // pred_check
      _
    $region27: #{tpu_custom_call.1} parent=1 // pred_check_branch
      %323 = sbr.rel (0) target = $region29
    $region28: #{tpu_custom_call.1} parent=1 // pred_region
      %324 = dma.done [#allocation4], 512
    $region29: #{tpu_custom_call.1} parent=1 // pred_fallthru
      _
    %325 = vsyncpa [#allocation3], 1
    %326 = vsyncpa [#allocation6], 1
    %327 = vsyncpa [#allocation4], 1

</llo_original>
